<compile_context>
chip_gen: v7x
topology: tpu7x:2x2x1
jax: 0.10.0
libtpu: 0.0.40
codegen_flags: <defaults>
</compile_context>

<pallas_src>
import functools

import jax
import jax.numpy as jnp
from jax.experimental import pallas as pl
from jax.experimental.pallas import tpu as pltpu


def _round_up(x, m):
    return ((x + m - 1) // m) * m


def _vmem_limit_bytes():
    """Generation-aware scoped-VMEM limit (v5e/v6e: 128 MiB physical,
    v7x: 64 MiB).  Conservative fallback if the query is unavailable."""
    try:
        cap = int(pltpu.get_tpu_info().vmem_capacity_bytes)
    except Exception:
        cap = 64 * 1024 * 1024
    return int(min(cap * 3 // 4, 100 * 1024 * 1024))


# ---------------------------------------------------------------------------
# Weight folding: conv1 o [conv_cls | conv_loc], bin-major packed + lane pad.
# ---------------------------------------------------------------------------
def pack_folded_head(w1, b1, wc, bc, wl, bl, bin_size, num_classes):
    """Returns (Wt, bt, Cpad): Wt (Cpad, Cin) bf16, bt (Cpad, 1) f32 with
    packed channel  b*Cb + c : c <  Ccls -> cls class c of bin b,
                               c >= Ccls -> loc coord (c-Ccls) of bin b."""
    B2 = bin_size * bin_size
    Ccls = num_classes + 1
    Cb = Ccls + 4
    Cmid = w1.shape[1]
    Ctot = B2 * Cb
    Cpad = _round_up(Ctot, 128)
    # torch channel order is c*B2 + bin -> reshape to (.., C, B2) then swap.
    wc_bm = wc.reshape(Cmid, Ccls, B2).transpose(0, 2, 1)      # (Cmid, B2, Ccls)
    wl_bm = wl.reshape(Cmid, 4, B2).transpose(0, 2, 1)         # (Cmid, B2, 4)
    w2 = jnp.concatenate([wc_bm, wl_bm], axis=2).reshape(Cmid, Ctot)
    bc_bm = bc.reshape(1, Ccls, B2).transpose(0, 2, 1)
    bl_bm = bl.reshape(1, 4, B2).transpose(0, 2, 1)
    b2 = jnp.concatenate([bc_bm, bl_bm], axis=2).reshape(1, Ctot)
    # No nonlinearity between conv1 and conv_cls/conv_loc -> fold exactly.
    wf = w1 @ w2                     # (Cin, Ctot)
    bf = b1 @ w2 + b2                # (1, Ctot)
    if Cpad != Ctot:
        wf = jnp.pad(wf, ((0, 0), (0, Cpad - Ctot)))
        bf = jnp.pad(bf, ((0, 0), (0, Cpad - Ctot)))
    return wf.T.astype(jnp.bfloat16), bf.T.astype(jnp.float32), Cpad


# ---------------------------------------------------------------------------
# Kernel A: folded 1x1 conv head, one MXU matmul per native-NCHW pixel tile.
# ---------------------------------------------------------------------------
def _head_kernel(x_ref, wt_ref, bt_ref, out_ref):
    # x_ref: (1, Cin, TP) f32, wt_ref: (Cpad, Cin) bf16, bt_ref: (Cpad, 1) f32.
    x = x_ref[0].astype(jnp.bfloat16)
    y = jnp.dot(wt_ref[...], x, preferred_element_type=jnp.float32)
    out_ref[0] = (y + bt_ref[...]).astype(jnp.bfloat16)


def _pick_hw_tile(HW, Cin, Cpad, budget):
    """Pixel-tile along H*W.  Counts double-buffered inputs/outputs, the
    in-kernel bf16 copy of x and the f32 matmul result."""
    def need(tp):
        return (2 * tp * Cin * 4          # x block (f32), double buffered
                + 2 * Cpad * Cin * 2      # folded weight (bf16), double buffered
                + 2 * Cpad * 4            # bias
                + tp * Cin * 2            # bf16 copy of x tile
                + tp * Cpad * 4           # f32 result before bf16 cast
                + 2 * tp * Cpad * 2)      # out block (bf16), double buffered
    if need(HW) <= budget:
        return HW, HW                     # one full-HW tile, no padding at all
    tp = 2048
    while tp > 128 and need(tp) > budget:
        tp //= 2
    return tp, _round_up(HW, tp)


def conv_head(x_ncp, wt, bt, *, tp, vmem_limit):
    N, Cin, HWpad = x_ncp.shape
    Cpad = wt.shape[0]
    return pl.pallas_call(
        _head_kernel,
        out_shape=jax.ShapeDtypeStruct((N, Cpad, HWpad), jnp.bfloat16),
        grid_spec=pltpu.PrefetchScalarGridSpec(
            num_scalar_prefetch=0,
            grid=(N, HWpad // tp),
            in_specs=[
                pl.BlockSpec((1, Cin, tp), lambda n, t: (n, 0, t)),
                pl.BlockSpec((Cpad, Cin), lambda n, t: (0, 0)),
                pl.BlockSpec((Cpad, 1), lambda n, t: (0, 0)),
            ],
            out_specs=pl.BlockSpec((1, Cpad, tp), lambda n, t: (n, 0, t)),
        ),
        compiler_params=pltpu.CompilerParams(
            dimension_semantics=("parallel", "parallel"),
            vmem_limit_bytes=vmem_limit),
    )(x_ncp, wt, bt)


# ---------------------------------------------------------------------------
# Kernel B: position-sensitive RoI pooling, TR RoIs (both maps) per MXU matmul.
# ---------------------------------------------------------------------------
def _psroi_kernel(gimg_ref, bnd_ref, feat_ref, out_ref, *, W):
    del gimg_ref                                   # used by index_maps only
    HWpad = feat_ref.shape[2]
    # Pixel coordinates, computed once per grid step as a (HWpad, 1) column.
    p = jax.lax.broadcasted_iota(jnp.float32, (HWpad, 1), 0)
    hh = jnp.floor(p / float(W))
    ww = p - hh * float(W)
    # Precomputed per-(roi, bin) window bounds / inverse area, bins on lanes.
    hstart = bnd_ref[0, 0:1, :]
    hend = bnd_ref[0, 1:2, :]
    wstart = bnd_ref[0, 2:3, :]
    wend = bnd_ref[0, 3:4, :]
    inv = bnd_ref[0, 4:5, :]
    inb = (hh >= hstart) & (hh < hend) & (ww >= wstart) & (ww < wend)
    mask = jnp.where(inb, 1.0, 0.0).astype(jnp.bfloat16)   # binary: exact in bf16
    # One matmul pools every channel over all bins of TR RoIs:
    # (Cpad, HWpad) @ (HWpad, TR*B2) -> (Cpad, TR*B2), f32 accumulation.
    pooled = jnp.dot(feat_ref[0], mask, preferred_element_type=jnp.float32)
    out_ref[0] = pooled * inv                      # 1/count applied in f32


def psroi_pool(feat, bounds, group_img, *, W, vmem_limit):
    N, Cpad, HWpad = feat.shape
    G, NB, TRB2 = bounds.shape
    kernel = functools.partial(_psroi_kernel, W=W)
    return pl.pallas_call(
        kernel,
        out_shape=jax.ShapeDtypeStruct((G, Cpad, TRB2), jnp.float32),
        grid_spec=pltpu.PrefetchScalarGridSpec(
            num_scalar_prefetch=1,                 # group -> image index (SMEM)
            grid=(G,),
            in_specs=[
                pl.BlockSpec((1, NB, TRB2), lambda g, gimg: (g, 0, 0)),
                pl.BlockSpec((1, Cpad, HWpad), lambda g, gimg: (gimg[g], 0, 0)),
            ],
            out_specs=pl.BlockSpec((1, Cpad, TRB2), lambda g, gimg: (g, 0, 0)),
        ),
        compiler_params=pltpu.CompilerParams(
            dimension_semantics=("parallel",),
            vmem_limit_bytes=vmem_limit),
    )(group_img, bounds, feat)


# ---------------------------------------------------------------------------
# Wrapper-side (tiny) precomputation: PSRoIPool windows + RoI grouping.
# ---------------------------------------------------------------------------
def psroi_bounds(rois, *, bin_size, scale, H, W):
    """Exact torchvision PSRoIPool window math, per (roi, bin).  Returns
    (R, B2, 8) = [hstart, hend, wstart, wend, 1/count, 0, 0, 0]."""
    x1, y1, x2, y2 = rois[:, 0], rois[:, 1], rois[:, 2], rois[:, 3]
    # roundf(c * scale); floor(x+0.5) matches for non-negative RPN proposals.
    rsw = jnp.floor(x1 * scale + 0.5)
    rsh = jnp.floor(y1 * scale + 0.5)
    rew = jnp.floor(x2 * scale + 0.5)
    reh = jnp.floor(y2 * scale + 0.5)
    roi_w = jnp.maximum(rew - rsw, 1.0)
    roi_h = jnp.maximum(reh - rsh, 1.0)
    bw = roi_w / bin_size
    bh = roi_h / bin_size
    pf = jnp.arange(bin_size, dtype=jnp.float32)
    hstart = jnp.clip(jnp.floor(pf[None, :] * bh[:, None] + rsh[:, None]), 0.0, float(H))
    hend = jnp.clip(jnp.ceil((pf[None, :] + 1.0) * bh[:, None] + rsh[:, None]), 0.0, float(H))
    wstart = jnp.clip(jnp.floor(pf[None, :] * bw[:, None] + rsw[:, None]), 0.0, float(W))
    wend = jnp.clip(jnp.ceil((pf[None, :] + 1.0) * bw[:, None] + rsw[:, None]), 0.0, float(W))
    # Bin index b = ph * bin_size + pw.
    hs = jnp.repeat(hstart, bin_size, axis=1)
    he = jnp.repeat(hend, bin_size, axis=1)
    ws = jnp.tile(wstart, (1, bin_size))
    we = jnp.tile(wend, (1, bin_size))
    count = (he - hs) * (we - ws)
    empty = (he <= hs) | (we <= ws)
    inv = jnp.where(empty, 0.0, 1.0 / jnp.maximum(count, 1.0))
    zeros = jnp.zeros_like(inv)
    return jnp.stack([hs, he, ws, we, inv, zeros, zeros, zeros], axis=-1)


def _group_rois(idx, R, N, TR):
    """Group RoIs per image, TR per group.  Returns (slot, group_img, G):
    slot[r] is the RoI's row in the padded (G*TR) layout, group_img[g] the
    image whose feature block group g reads (empty tail groups are clipped)."""
    counts = jnp.sum(idx[None, :] == jnp.arange(N, dtype=jnp.int32)[:, None], axis=1)
    gpi = (counts + TR - 1) // TR                 # groups per image
    cum = jnp.cumsum(gpi)
    goff = cum - gpi                              # exclusive prefix of groups
    earlier = jnp.tril(jnp.ones((R, R), dtype=jnp.int32), k=-1)
    same = (idx[:, None] == idx[None, :]).astype(jnp.int32)
    pos = jnp.sum(same * earlier, axis=1)         # rank within own image
    slot = goff[idx] * TR + pos
    G = pl.cdiv(R, TR) + N                        # static upper bound on groups
    group_img = jnp.clip(
        jnp.searchsorted(cum, jnp.arange(G, dtype=jnp.int32), side="right"),
        0, N - 1).astype(jnp.int32)
    return slot, group_img, G


# ---------------------------------------------------------------------------
# RFCN forward (post extractor / RPN) == RFCNRoIhead.forward
# ---------------------------------------------------------------------------
def rfcn_forward(h_nchw, rois, roi_indices, params, *, bin_size, num_classes,
                 scale, rois_per_step=32):
    """Mirrors RFCN.forward after the backbone/RPN: returns
    (roi_scores, roi_locs, rois, roi_indices)."""
    N, Cin, H, W = h_nchw.shape
    HW = H * W
    R = rois.shape[0]
    B2 = bin_size * bin_size
    Ccls = num_classes + 1
    Cb = Ccls + 4

    vmem_limit = _vmem_limit_bytes()
    budget = max(vmem_limit - 2 * 1024 * 1024, 8 * 1024 * 1024)

    # Fold conv1 with the bin-major packed [conv_cls | conv_loc] weights.
    wt, bt, Cpad = pack_folded_head(params["w1"], params["b1"],
                                    params["wc"], params["bc"],
                                    params["wl"], params["bl"],
                                    bin_size, num_classes)

    # Native NCHW layout -> free reshape; no HBM transpose of the activation.
    x_ncp = h_nchw.reshape(N, Cin, HW)
    tp, HWpad = _pick_hw_tile(HW, Cin, Cpad, budget)
    if HWpad != HW:
        x_ncp = jnp.pad(x_ncp, ((0, 0), (0, 0), (0, HWpad - HW)))

    # Kernel A: position-sensitive score/loc maps, (N, Cpad, HWpad) bf16.
    feat = conv_head(x_ncp, wt, bt, tp=tp, vmem_limit=vmem_limit)

    # Per-(RoI, bin) pooling windows (tiny, plain JAX).
    bnd = psroi_bounds(rois, bin_size=bin_size, scale=scale, H=H, W=W)

    # Group RoIs per image, TR per grid step; padded slots stay all-zero
    # (hstart == hend == 0, inv == 0) so they pool to exactly 0.
    TR = rois_per_step
    idx = roi_indices.astype(jnp.int32)
    slot, group_img, G = _group_rois(idx, R, N, TR)
    bnd_pad = jnp.zeros((G * TR, B2, 8), jnp.float32).at[slot].set(bnd)
    # Kernel layout: (G, 8, B2*TR), column j = bin*TR + roi_in_group.
    bnd_k = (bnd_pad.reshape(G, TR, B2, 8)
             .transpose(0, 3, 2, 1).reshape(G, 8, B2 * TR))

    pooled = psroi_pool(feat, bnd_k, group_img, W=W, vmem_limit=vmem_limit)

    # Diagonal (bin, channel-group) selection; tiny tensors, plain JAX.
    per_bin = jnp.stack(
        [pooled[:, b * Cb:(b + 1) * Cb, b * TR:(b + 1) * TR] for b in range(B2)],
        axis=1)                                          # (G, B2, Cb, TR)
    per_roi = per_bin.transpose(0, 3, 1, 2).reshape(G * TR, B2, Cb)
    vals = per_roi[slot]                                 # (R, B2, Cb)
    scores = vals[:, :, :Ccls]
    locs = vals[:, :, Ccls:Ccls + 4]

    # -> PyTorch PSRoIPool output layout (R, C, bin, bin).
    roi_scores = scores.reshape(R, bin_size, bin_size, Ccls).transpose(0, 3, 1, 2)
    roi_locs = locs.reshape(R, bin_size, bin_size, 4).transpose(0, 3, 1, 2)
    return roi_scores, roi_locs, rois, roi_indices


def init_params(key, cin, cmid, bin_size, num_classes):
    """Deterministic stand-ins for conv1 / conv_cls / conv_loc weights
    (1x1 convs stored directly as (Cin, Cout) matmul matrices)."""
    b2 = bin_size * bin_size
    c_cls = b2 * (num_classes + 1)
    c_loc = b2 * 4
    ks = jax.random.split(key, 6)
    return {
        "w1": 0.1 * jax.random.normal(ks[0], (cin, cmid), jnp.float32),
        "b1": 0.1 * jax.random.normal(ks[1], (1, cmid), jnp.float32),
        "wc": 0.1 * jax.random.normal(ks[2], (cmid, c_cls), jnp.float32),
        "bc": 0.1 * jax.random.normal(ks[3], (1, c_cls), jnp.float32),
        "wl": 0.1 * jax.random.normal(ks[4], (cmid, c_loc), jnp.float32),
        "bl": 0.1 * jax.random.normal(ks[5], (1, c_loc), jnp.float32),
    }


if __name__ == "__main__":
    # Small stand-in shapes for the real RFCN config
    # (real: Cin=2048, Cmid=1024, bin=3, feat_stride=32).
    N, Cin, H, W = 2, 16, 16, 16
    Cmid = 32
    bin_size = 3
    num_classes = 4
    feat_stride = 32
    scale = 1.0 / feat_stride
    R = 8

    key = jax.random.PRNGKey(0)
    k_param, k_h, k_x1, k_y1, k_w, k_hh = jax.random.split(key, 6)

    params = init_params(k_param, Cin, Cmid, bin_size, num_classes)

    # Backbone feature map (stand-in for resnet-101 extractor output).
    h = jax.random.normal(k_h, (N, Cin, H, W), jnp.float32)

    # Stand-in RPN proposals in image coordinates (x1, y1, x2, y2).
    img_w, img_h = W * feat_stride, H * feat_stride
    x1 = jax.random.uniform(k_x1, (R,), minval=0.0, maxval=0.6 * img_w)
    y1 = jax.random.uniform(k_y1, (R,), minval=0.0, maxval=0.6 * img_h)
    bw = jax.random.uniform(k_w, (R,), minval=64.0, maxval=0.4 * img_w)
    bh = jax.random.uniform(k_hh, (R,), minval=64.0, maxval=0.4 * img_h)
    x2 = jnp.minimum(x1 + bw, float(img_w))
    y2 = jnp.minimum(y1 + bh, float(img_h))
    rois = jnp.stack([x1, y1, x2, y2], axis=1).astype(jnp.float32)
    roi_indices = (jnp.arange(R, dtype=jnp.int32) % N)

    roi_scores, roi_locs, rois_out, roi_idx_out = rfcn_forward(
        h, rois, roi_indices, params,
        bin_size=bin_size, num_classes=num_classes, scale=scale)

    jax.block_until_ready((roi_scores, roi_locs, rois_out, roi_idx_out))
    assert roi_scores.shape == (R, num_classes + 1, bin_size, bin_size)
    assert roi_locs.shape == (R, 4, bin_size, bin_size)
    assert bool(jnp.all(jnp.isfinite(roi_scores)))
    assert bool(jnp.all(jnp.isfinite(roi_locs)))
    print("KERNEL_OK")
</pallas_src>

<mosaic_0001>
module attributes {stable_mosaic.version = 11 : i64} {
  func.func @_head_kernel(%arg0: i32, %arg1: i32, %arg2: memref<1x16x256xf32, #tpu.memory_space<vmem>>, %arg3: memref<128x16xbf16, #tpu.memory_space<vmem>>, %arg4: memref<128x1xf32, #tpu.memory_space<vmem>>, %arg5: memref<1x128x256xbf16, #tpu.memory_space<vmem>>) attributes {dimension_semantics = [#tpu.dimension_semantics<parallel>, #tpu.dimension_semantics<parallel>], iteration_bounds = array<i64: 2, 1>, scalar_prefetch = 0 : i64, scratch_operands = 0 : i64, tpu.core_type = #tpu.core_type<tc>, window_params = [{transform_indices = @transform_0, window_bounds = array<i64: 1, 16, 256>}, {pipeline_mode = #tpu.pipeline_mode<synchronous>, transform_indices = @transform_1, window_bounds = array<i64: 128, 16>}, {pipeline_mode = #tpu.pipeline_mode<synchronous>, transform_indices = @transform_2, window_bounds = array<i64: 128, 1>}, {transform_indices = @transform_3, window_bounds = array<i64: 1, 128, 256>}]} {
    %c0 = arith.constant 0 : index
    %c0_0 = arith.constant 0 : index
    %c0_1 = arith.constant 0 : index
    %0 = vector.load %arg2[%c0, %c0_0, %c0_1] : memref<1x16x256xf32, #tpu.memory_space<vmem>>, vector<1x16x256xf32>
    %1 = vector.shape_cast %0 : vector<1x16x256xf32> to vector<16x256xf32>
    %2 = arith.truncf %1 : vector<16x256xf32> to vector<16x256xbf16>
    %c0_2 = arith.constant 0 : index
    %c0_3 = arith.constant 0 : index
    %3 = vector.load %arg3[%c0_2, %c0_3] : memref<128x16xbf16, #tpu.memory_space<vmem>>, vector<128x16xbf16>
    %cst = arith.constant dense<0.000000e+00> : vector<128x256xf32>
    %4 = tpu.matmul %3, %2, %cst {dimension_numbers = #tpu.dot_dimension_numbers<[1], [0], [0], [1], [0, 0, 1, 1], [], []>} : vector<128x16xbf16>, vector<16x256xbf16>, vector<128x256xf32> -> vector<128x256xf32>
    %c0_4 = arith.constant 0 : index
    %c0_5 = arith.constant 0 : index
    %5 = vector.load %arg4[%c0_4, %c0_5] : memref<128x1xf32, #tpu.memory_space<vmem>>, vector<128x1xf32>
    %6 = vector.broadcast %5 : vector<128x1xf32> to vector<128x256xf32>
    %7 = arith.addf %4, %6 : vector<128x256xf32>
    %8 = arith.truncf %7 : vector<128x256xf32> to vector<128x256xbf16>
    %c0_6 = arith.constant 0 : index
    %c0_7 = arith.constant 0 : index
    %c0_8 = arith.constant 0 : index
    %9 = vector.load %arg5[%c0_6, %c0_7, %c0_8] : memref<1x128x256xbf16, #tpu.memory_space<vmem>>, vector<1x128x256xbf16>
    %10 = vector.shape_cast %9 : vector<1x128x256xbf16> to vector<128x256xbf16>
    %11 = vector.shape_cast %8 : vector<128x256xbf16> to vector<1x128x256xbf16>
    tpu.vector_store %arg5[%c0_6, %c0_7, %c0_8], %11 {strides = array<i32>} : memref<1x128x256xbf16, #tpu.memory_space<vmem>>, vector<1x128x256xbf16>,
    return
  }
  func.func @transform_0(%arg0: i32, %arg1: i32) -> (i32, i32, i32) {
    %c0_i32 = arith.constant 0 : i32
    %c0_i32_0 = arith.constant 0 : i32
    return %arg0, %c0_i32, %arg1 : i32, i32, i32
  }
  func.func @transform_1(%arg0: i32, %arg1: i32) -> (i32, i32) {
    %c0_i32 = arith.constant 0 : i32
    %c0_i32_0 = arith.constant 0 : i32
    %c0_i32_1 = arith.constant 0 : i32
    return %c0_i32, %c0_i32_0 : i32, i32
  }
  func.func @transform_2(%arg0: i32, %arg1: i32) -> (i32, i32) {
    %c0_i32 = arith.constant 0 : i32
    %c0_i32_0 = arith.constant 0 : i32
    %c0_i32_1 = arith.constant 0 : i32
    return %c0_i32, %c0_i32_0 : i32, i32
  }
  func.func @transform_3(%arg0: i32, %arg1: i32) -> (i32, i32, i32) {
    %c0_i32 = arith.constant 0 : i32
    %c0_i32_0 = arith.constant 0 : i32
    return %arg0, %c0_i32, %arg1 : i32, i32, i32
  }
}

</mosaic_0001>

<llo_original>
// kernel: tpu_custom_call.1
$region0: #{tpu_custom_call.1}
  #allocation0 [shape = 'u32[]', space=smem, size = 0x4, offset = 0x4, fixed_abs, tag = 'smem constant byte address 0x4 - core index']
  #allocation1 [shape = 'u32[144,128]{1,0:T(1,128)}', space=vmem, size = 0x12000, scoped, tag = 'internal scratch']
  %s0 = inlined_call_operand.vmem [shape: f32[2,16,256], index: 0, kind: input, shape index: {}]
  %s1 = inlined_call_operand.vmem [shape: bf16[128,16], index: 1, kind: input, shape index: {}]
  %s2 = inlined_call_operand.vmem [shape: f32[128,1], index: 2, kind: input, shape index: {}]
  %s3 = inlined_call_operand.hbm [shape: bf16[2,128,256], index: 3, kind: output, shape index: {}]
  %s4 = sld [smem:[#allocation0]]
  $region45: #{tpu_custom_call.1} parent=0
    _
  %s6 = ssub.s32 1, %s4
  %s7 = scalar_select 0, %s6, %s4
  $region1: #{tpu_custom_call.1} parent=0
    #allocation2 [shape = 'u8[131072]{0}', space=vmem, size = 0x20000, scoped, tag = 'output window, operand 0']
    #allocation3 [shape = 's32[2]{0}', space=sflag, size = 0x8, scoped, tag = 'scoped memory for tpu_custom_call.1']
    %8 = vsyncpa [#allocation3], 0
    %s9 = scalar_lea.sflag [#allocation3], 1
    %10 = vsyncpa %s9, 0
    loop: start=0, step=1, limit=4
    $region2: #{tpu_custom_call.1} parent=1 // loop_pre_header
      _
    $region3: #{tpu_custom_call.1} parent=1 // loop_header
      %s12 = sphi 0, %s16
      %p13 = scmp.ge.s32.totalorder %s12, 4
      %s19 = sphi 0, %s31
      %s20 = sphi 0, %s27
      %s21 = sphi 0, %s19
      %s22 = sphi 0, %s20
      %s23 = sphi 0, %s21
      %s24 = sphi 0, %s22
      %s36 = sphi 0, %s38
      %s39 = sphi 0, %s36
      %s40 = sphi 0, %s39
      %s56 = sphi 0, %s40
      %s60 = sphi 0, %s60
      %s62 = sphi 0, %s60
      %s63 = sphi 0, %s62
      %s77 = sphi 0, %s63
      %s81 = sphi 0, %s81
      %s83 = sphi 0, %s81
      %s84 = sphi 0, %s83
      %s98 = sphi 0, %s84
      %s106 = sphi 0, %s108
      %s109 = sphi 0, %s106
      %s110 = sphi 0, %s109
      %s126 = sphi 0, %s110
    $region4: #{tpu_custom_call.1} parent=1 // loop_header_branch
      %15 = sbr.rel (%p13) target = $region8
    $region5: #{tpu_custom_call.1} parent=1 // loop_body
      %s17 = ssub.s32 %s12, 1
      %s18 = ssub.s32 %s12, 2
      %s25 = sadd.s32 1, %s20
      %p26 = scmp.ge.s32.totalorder %s25, 1
      %s27 = scalar_select %p26, 0, %s25
      %s28 = sadd.s32 1, %s19
      %s29 = scalar_select %p26, %s28, %s19
      %p30 = scmp.ge.s32.totalorder %s29, 2
      %s31 = scalar_select %p30, 0, %s29
      %s32 = ssub.s32 %s19, %s31
      %s33 = ssub.s32 %s20, %s27
      %s34 = sor.u32 %s32, %s33
      %p35 = scmp.eq.s32.totalorder %s34, 0
      %s37 = sadd.s32 %s36, 1
      %s38 = scalar_select %p35, %s36, %s37
      %p41 = pneg %p35
      %p42 = scmp.eq.s32.totalorder %s12, 1
      %p43 = por %p41, %p42
      %p44 = scmp.ne.s32.totalorder %s36, %s39
      %p45 = scmp.eq.s32.totalorder %s12, 0
      %p46 = por %p44, %p45
      %p47 = scmp.ne.s32.totalorder %s36, %s39
      %p48 = scmp.eq.s32.totalorder %s17, 1
      %p49 = por %p47, %p48
      %p50 = scmp.ne.s32.totalorder %s39, %s40
      %p51 = scmp.eq.s32.totalorder %s17, 0
      %p52 = por %p50, %p51
      %p53 = scmp.ne.s32.totalorder %s39, %s40
      %p54 = scmp.eq.s32.totalorder %s18, 1
      %p55 = por %p53, %p54
      %p57 = scmp.ne.s32.totalorder %s40, %s56
      %p58 = scmp.eq.s32.totalorder %s18, 0
      %p59 = por %p57, %p58
      %s61 = sadd.s32 %s60, 1
      %p64 = scmp.eq.s32.totalorder %s12, 1
      %p65 = scmp.ne.s32.totalorder %s60, %s62
      %p66 = scmp.eq.s32.totalorder %s12, 0
      %p67 = por %p65, %p66
      %p68 = scmp.ne.s32.totalorder %s60, %s62
      %p69 = scmp.eq.s32.totalorder %s17, 1
      %p70 = por %p68, %p69
      %p71 = scmp.ne.s32.totalorder %s62, %s63
      %p72 = scmp.eq.s32.totalorder %s17, 0
      %p73 = por %p71, %p72
      %p74 = scmp.ne.s32.totalorder %s62, %s63
      %p75 = scmp.eq.s32.totalorder %s18, 1
      %p76 = por %p74, %p75
      %p78 = scmp.ne.s32.totalorder %s63, %s77
      %p79 = scmp.eq.s32.totalorder %s18, 0
      %p80 = por %p78, %p79
      %s82 = sadd.s32 %s81, 1
      %p85 = scmp.eq.s32.totalorder %s12, 1
      %p86 = scmp.ne.s32.totalorder %s81, %s83
      %p87 = scmp.eq.s32.totalorder %s12, 0
      %p88 = por %p86, %p87
      %p89 = scmp.ne.s32.totalorder %s81, %s83
      %p90 = scmp.eq.s32.totalorder %s17, 1
      %p91 = por %p89, %p90
      %p92 = scmp.ne.s32.totalorder %s83, %s84
      %p93 = scmp.eq.s32.totalorder %s17, 0
      %p94 = por %p92, %p93
      %p95 = scmp.ne.s32.totalorder %s83, %s84
      %p96 = scmp.eq.s32.totalorder %s18, 1
      %p97 = por %p95, %p96
      %p99 = scmp.ne.s32.totalorder %s84, %s98
      %p100 = scmp.eq.s32.totalorder %s18, 0
      %p101 = por %p99, %p100
      %s102 = ssub.s32 %s19, %s31
      %s103 = ssub.s32 %s20, %s27
      %s104 = sor.u32 %s102, %s103
      %p105 = scmp.eq.s32.totalorder %s104, 0
      %s107 = sadd.s32 %s106, 1
      %s108 = scalar_select %p105, %s106, %s107
      %p111 = pneg %p105
      %p112 = scmp.eq.s32.totalorder %s12, 1
      %p113 = por %p111, %p112
      %p114 = scmp.ne.s32.totalorder %s106, %s109
      %p115 = scmp.eq.s32.totalorder %s12, 0
      %p116 = por %p114, %p115
      %p117 = scmp.ne.s32.totalorder %s106, %s109
      %p118 = scmp.eq.s32.totalorder %s17, 1
      %p119 = por %p117, %p118
      %p120 = scmp.ne.s32.totalorder %s109, %s110
      %p121 = scmp.eq.s32.totalorder %s17, 0
      %p122 = por %p120, %p121
      %p123 = scmp.ne.s32.totalorder %s109, %s110
      %p124 = scmp.eq.s32.totalorder %s18, 1
      %p125 = por %p123, %p124
      %p127 = scmp.ne.s32.totalorder %s110, %s126
      %p128 = scmp.eq.s32.totalorder %s18, 0
      %p129 = por %p127, %p128
      %p130 = scmp.le.s32.totalorder 1, %s12
      %p131 = scmp.lt.s32.totalorder %s12, 3
      %p132 = pnand %p130, %p131
      %p133 = pneg %p132
      // Predicated region
      $region9: #{tpu_custom_call.1} parent=5 // pred_check
        _
      $region10: #{tpu_custom_call.1} parent=5 // pred_check_branch
        %135 = sbr.rel (%p132) target = $region12
      $region11: #{tpu_custom_call.1} parent=5 // pred_region
        %s136 = ssub.s32 %s12, 1
        // Predicated region
        $region13: #{tpu_custom_call.1} parent=11 // pred_check
          %p137 = pneg %p73
        $region14: #{tpu_custom_call.1} parent=11 // pred_check_branch
          %139 = sbr.rel (%p137) target = $region16
        $region15: #{tpu_custom_call.1} parent=11 // pred_region
          _
        $region16: #{tpu_custom_call.1} parent=11 // pred_fallthru
          _
        // Predicated region
        $region17: #{tpu_custom_call.1} parent=11 // pred_check
          %p140 = pneg %p94
        $region18: #{tpu_custom_call.1} parent=11 // pred_check_branch
          %142 = sbr.rel (%p140) target = $region20
        $region19: #{tpu_custom_call.1} parent=11 // pred_region
          _
        $region20: #{tpu_custom_call.1} parent=11 // pred_fallthru
          _
      $region12: #{tpu_custom_call.1} parent=5 // pred_fallthru
        _
      %p143 = scmp.lt.s32.totalorder %s12, 2
      // Predicated region
      $region21: #{tpu_custom_call.1} parent=5 // pred_check
        %p144 = pneg %p143
      $region22: #{tpu_custom_call.1} parent=5 // pred_check_branch
        %146 = sbr.rel (%p144) target = $region24
      $region23: #{tpu_custom_call.1} parent=5 // pred_region
        // Predicated region
        $region25: #{tpu_custom_call.1} parent=23 // pred_check
          %p147 = pneg %p46
        $region26: #{tpu_custom_call.1} parent=23 // pred_check_branch
          %149 = sbr.rel (%p147) target = $region28
        $region27: #{tpu_custom_call.1} parent=23 // pred_region
          %s150 = smul.u32 2, %s20
          %p151 = scmp.lt.s32.totalorder %s19, 1
          %s152 = scalar_select %p151, %s19, 1
          %p153 = scmp.lt.s32.totalorder %s150, 1
          %s154 = scalar_select %p153, %s150, 1
          %s155 = smul.addr %s152, 4
          %s156 = sadd.s32 %s154, %s155
          %s157 = smul.addr %s156, 8
          %s158 = scalar_lea.vmem %s0, %s157
          %s159 = smul.u32 2, %s20
        $region28: #{tpu_custom_call.1} parent=23 // pred_fallthru
          _
      $region24: #{tpu_custom_call.1} parent=5 // pred_fallthru
        _
      %p160 = scmp.le.s32.totalorder 1, %s12
      %p161 = scmp.lt.s32.totalorder %s12, 3
      %p162 = pnand %p160, %p161
      %p163 = pneg %p162
      // Predicated region
      $region29: #{tpu_custom_call.1} parent=5 // pred_check
        _
      $region30: #{tpu_custom_call.1} parent=5 // pred_check_branch
        %165 = sbr.rel (%p162) target = $region32
      $region31: #{tpu_custom_call.1} parent=5 // pred_region
        %s166 = ssub.s32 %s12, 1
        %s167 = smul.u32 2, %s22
        %p168 = scmp.lt.s32.totalorder %s21, 1
        %s169 = scalar_select %p168, %s21, 1
        %p170 = scmp.lt.s32.totalorder %s167, 1
        %s171 = scalar_select %p170, %s167, 1
        %s172 = smul.addr %s169, 4
        %s173 = sadd.s32 %s171, %s172
        %s174 = smul.addr %s173, 8
        %s175 = scalar_lea.vmem %s0, %s174
        %p176 = pneg %p52
        %p177 = pneg %p49
        %p178 = pneg %p73
        %p179 = pneg %p70
        %p180 = pneg %p94
        %p181 = pneg %p91
        %p182 = pneg %p122
        %p183 = pneg %p119
        %s184 = sand.u32 %s109, 1
        %s185 = scalar_lea.sflag [#allocation3], %s184
        %s186 = sand.u32 %s109, 1
        %s187 = smul.addr %s186, 128
        %s188 = scalar_lea.vmem [#allocation2], %s187
        %s189 = smul.u32 2, %s22
        %p190 = scmp.lt.s32.totalorder %s21, 1
        %s191 = scalar_select %p190, %s21, 1
        %p192 = scmp.lt.s32.totalorder %s189, 1
        %s193 = scalar_select %p192, %s189, 1
        %s194 = smul.addr %s191, 4
        %s195 = sadd.s32 %s193, %s194
        %s196 = smul.addr %s195, 8
        %s197 = scalar_lea.vmem %s0, %s196
        %s198 = smul.u32 2, %s22
        %s199 = smul.u32 2, %s22
        %v201 = vld [vmem:[%s197] sm:$0xff]
        %v202 = vld [vmem:[%s197 + $0x8] sm:$0xff]
        %v203 = vld [vmem:[%s197 + $0x10] sm:$0xff]
        %v204 = vld [vmem:[%s197 + $0x18] sm:$0xff]
        %v205 = vpack.c.bf16 %v203, %v201
        %v206 = vpack.c.bf16 %v204, %v202
        %v207 = vld [vmem:[%s1] sm:$0xf]
        %v208 = vld [vmem:[%s1 + $0x4] sm:$0xf]
        %v209 = vld [vmem:[%s1 + $0x8] sm:$0xf]
        %v210 = vld [vmem:[%s1 + $0xc] sm:$0xf]
        %v211 = vld [vmem:[%s1 + $0x10] sm:$0xf]
        %v212 = vld [vmem:[%s1 + $0x14] sm:$0xf]
        %v213 = vld [vmem:[%s1 + $0x18] sm:$0xf]
        %v214 = vld [vmem:[%s1 + $0x1c] sm:$0xf]
        %v215 = vld [vmem:[%s1 + $0x20] sm:$0xf]
        %v216 = vld [vmem:[%s1 + $0x24] sm:$0xf]
        %v217 = vld [vmem:[%s1 + $0x28] sm:$0xf]
        %v218 = vld [vmem:[%s1 + $0x2c] sm:$0xf]
        %v219 = vld [vmem:[%s1 + $0x30] sm:$0xf]
        %v220 = vld [vmem:[%s1 + $0x34] sm:$0xf]
        %v221 = vld [vmem:[%s1 + $0x38] sm:$0xf]
        %v222 = vld [vmem:[%s1 + $0x3c] sm:$0xf]
        %v223 = vld [vmem:[%s2] sm:$0xff]
        %v224 = vld [vmem:[%s2 + $0x8] sm:$0xff]
        %v225 = vld [vmem:[%s2 + $0x10] sm:$0xff]
        %v226 = vld [vmem:[%s2 + $0x18] sm:$0xff]
        %v227 = vld [vmem:[%s2 + $0x20] sm:$0xff]
        %v228 = vld [vmem:[%s2 + $0x28] sm:$0xff]
        %v229 = vld [vmem:[%s2 + $0x30] sm:$0xff]
        %v230 = vld [vmem:[%s2 + $0x38] sm:$0xff]
        %v231 = vld [vmem:[%s2 + $0x40] sm:$0xff]
        %v232 = vld [vmem:[%s2 + $0x48] sm:$0xff]
        %v233 = vld [vmem:[%s2 + $0x50] sm:$0xff]
        %v234 = vld [vmem:[%s2 + $0x58] sm:$0xff]
        %v235 = vld [vmem:[%s2 + $0x60] sm:$0xff]
        %v236 = vld [vmem:[%s2 + $0x68] sm:$0xff]
        %v237 = vld [vmem:[%s2 + $0x70] sm:$0xff]
        %v238 = vld [vmem:[%s2 + $0x78] sm:$0xff]
        %240 = vset.pattern.permute.xlu0 0
        %241 = vperm.xlu0 %240, %v223
        %v242 = vpop.permute.xlu0 %241
        %245 = vset.pattern.permute.xlu0 0
        %246 = vperm.xlu0 %245, %v224
        %v247 = vpop.permute.xlu0 %246
        %250 = vset.pattern.permute.xlu0 0
        %251 = vperm.xlu0 %250, %v225
        %v252 = vpop.permute.xlu0 %251
        %255 = vset.pattern.permute.xlu0 0
        %256 = vperm.xlu0 %255, %v226
        %v257 = vpop.permute.xlu0 %256
        %260 = vset.pattern.permute.xlu0 0
        %261 = vperm.xlu0 %260, %v227
        %v262 = vpop.permute.xlu0 %261
        %265 = vset.pattern.permute.xlu0 0
        %266 = vperm.xlu0 %265, %v228
        %v267 = vpop.permute.xlu0 %266
        %270 = vset.pattern.permute.xlu0 0
        %271 = vperm.xlu0 %270, %v229
        %v272 = vpop.permute.xlu0 %271
        %275 = vset.pattern.permute.xlu0 0
        %276 = vperm.xlu0 %275, %v230
        %v277 = vpop.permute.xlu0 %276
        %280 = vset.pattern.permute.xlu0 0
        %281 = vperm.xlu0 %280, %v231
        %v282 = vpop.permute.xlu0 %281
        %285 = vset.pattern.permute.xlu0 0
        %286 = vperm.xlu0 %285, %v232
        %v287 = vpop.permute.xlu0 %286
        %290 = vset.pattern.permute.xlu0 0
        %291 = vperm.xlu0 %290, %v233
        %v292 = vpop.permute.xlu0 %291
        %295 = vset.pattern.permute.xlu0 0
        %296 = vperm.xlu0 %295, %v234
        %v297 = vpop.permute.xlu0 %296
        %300 = vset.pattern.permute.xlu0 0
        %301 = vperm.xlu0 %300, %v235
        %v302 = vpop.permute.xlu0 %301
        %305 = vset.pattern.permute.xlu0 0
        %306 = vperm.xlu0 %305, %v236
        %v307 = vpop.permute.xlu0 %306
        %310 = vset.pattern.permute.xlu0 0
        %311 = vperm.xlu0 %310, %v237
        %v312 = vpop.permute.xlu0 %311
        %315 = vset.pattern.permute.xlu0 0
        %316 = vperm.xlu0 %315, %v238
        %v317 = vpop.permute.xlu0 %316
        %v335 = vunpack.c.l.b16 %v207
        %v336 = vunpack.c.l.b16 %v208
        %v337 = vunpack.c.l.b16 %v209
        %v338 = vunpack.c.l.b16 %v210
        %v339 = vunpack.c.l.b16 %v211
        %v340 = vunpack.c.l.b16 %v212
        %v341 = vunpack.c.l.b16 %v213
        %v342 = vunpack.c.l.b16 %v214
        %v343 = vunpack.c.l.b16 %v215
        %v344 = vunpack.c.l.b16 %v216
        %v345 = vunpack.c.l.b16 %v217
        %v346 = vunpack.c.l.b16 %v218
        %v347 = vunpack.c.l.b16 %v219
        %v348 = vunpack.c.l.b16 %v220
        %v349 = vunpack.c.l.b16 %v221
        %v350 = vunpack.c.l.b16 %v222
        %v351 = vpack.c.b16 %v336, %v335
        %v352 = vpack.c.b16 %v338, %v337
        %v353 = vpack.c.b16 %v340, %v339
        %v354 = vpack.c.b16 %v342, %v341
        %v355 = vpack.c.b16 %v344, %v343
        %v356 = vpack.c.b16 %v346, %v345
        %v357 = vpack.c.b16 %v348, %v347
        %v358 = vpack.c.b16 %v350, %v349
        %vm359 = vcmask 130048
        %v361 = vsel %vm359, %v351, 0
        %v364 = vsel %vm359, %v352, 0
        %v367 = vsel %vm359, %v353, 0
        %v370 = vsel %vm359, %v354, 0
        %v373 = vsel %vm359, %v355, 0
        %v376 = vsel %vm359, %v356, 0
        %v379 = vsel %vm359, %v357, 0
        %v382 = vsel %vm359, %v358, 0
        %384 = vmatprep.subr.bf16.mxu0 %v206
        %385 = vmatpush1.bf16.msra.mxu0 %v205
        %386 = vmatprep.subr.bf16.mxu0 0
        %387 = vmatpush1.bf16.msra.mxu0 0
        %388 = vmatprep.subr.bf16.mxu0 0
        %389 = vmatpush1.bf16.msra.mxu0 0
        %390 = vmatprep.subr.bf16.mxu0 0
        %391 = vmatpush1.bf16.msra.mxu0 0
        %392 = vmatprep.subr.bf16.mxu0 0
        %393 = vmatpush1.bf16.msra.mxu0 0
        %394 = vmatprep.subr.bf16.mxu0 0
        %395 = vmatpush1.bf16.msra.mxu0 0
        %396 = vmatprep.subr.bf16.mxu0 0
        %397 = vmatpush1.bf16.msra.mxu0 0
        %398 = vmatprep.subr.bf16.mxu0 0
        %399 = vmatpush1.bf16.msra.mxu0 0
        %400 = vmatprep.subr.bf16.mxu0 0
        %401 = vmatpush1.bf16.msra.mxu0 0
        %402 = vmatprep.subr.bf16.mxu0 0
        %403 = vmatpush1.bf16.msra.mxu0 0
        %404 = vmatprep.subr.bf16.mxu0 0
        %405 = vmatpush1.bf16.msra.mxu0 0
        %406 = vmatprep.subr.bf16.mxu0 0
        %407 = vmatpush1.bf16.msra.mxu0 0
        %408 = vmatprep.subr.bf16.mxu0 0
        %409 = vmatpush1.bf16.msra.mxu0 0
        %410 = vmatprep.subr.bf16.mxu0 0
        %411 = vmatpush1.bf16.msra.mxu0 0
        %412 = vmatprep.subr.bf16.mxu0 0
        %413 = vmatpush1.bf16.msra.mxu0 0
        %414 = vmatprep.subr.bf16.mxu0 0
        %415 = vmatpush1.bf16.msra.mxu0 0
        %416 = vmatprep.mubr.bf16.mxu0 0
        %417 = vmatmul.mubr.bf16.gmra.mrb[0].mxu0 %v361
        %v418 = vpop.f32.mrb[0].mxu0
        %v419 = vadd.f32 %v242, %v418
        %v420 = vpop.f32.mrb[0].mxu0
        %v421 = vadd.f32 %v242, %v420
        %v422 = vpop.f32.mrb[0].mxu0
        %v423 = vadd.f32 %v247, %v422
        %v424 = vpop.f32.mrb[0].mxu0
        %v425 = vadd.f32 %v247, %v424
        %426 = vmatprep.mubr.bf16.mxu0 0
        %427 = vmatmul.mubr.bf16.gmra.mrb[0].mxu0 %v364
        %v428 = vpop.f32.mrb[0].mxu0
        %v429 = vadd.f32 %v252, %v428
        %v430 = vpop.f32.mrb[0].mxu0
        %v431 = vadd.f32 %v252, %v430
        %v432 = vpop.f32.mrb[0].mxu0
        %v433 = vadd.f32 %v257, %v432
        %v434 = vpop.f32.mrb[0].mxu0
        %v435 = vadd.f32 %v257, %v434
        %436 = vmatprep.mubr.bf16.mxu0 0
        %437 = vmatmul.mubr.bf16.gmra.mrb[0].mxu0 %v367
        %v438 = vpop.f32.mrb[0].mxu0
        %v439 = vadd.f32 %v262, %v438
        %v440 = vpop.f32.mrb[0].mxu0
        %v441 = vadd.f32 %v262, %v440
        %v442 = vpop.f32.mrb[0].mxu0
        %v443 = vadd.f32 %v267, %v442
        %v444 = vpop.f32.mrb[0].mxu0
        %v445 = vadd.f32 %v267, %v444
        %446 = vmatprep.mubr.bf16.mxu0 0
        %447 = vmatmul.mubr.bf16.gmra.mrb[0].mxu0 %v370
        %v448 = vpop.f32.mrb[0].mxu0
        %v449 = vadd.f32 %v272, %v448
        %v450 = vpop.f32.mrb[0].mxu0
        %v451 = vadd.f32 %v272, %v450
        %v452 = vpop.f32.mrb[0].mxu0
        %v453 = vadd.f32 %v277, %v452
        %v454 = vpop.f32.mrb[0].mxu0
        %v455 = vadd.f32 %v277, %v454
        %456 = vmatprep.mubr.bf16.mxu0 0
        %457 = vmatmul.mubr.bf16.gmra.mrb[0].mxu0 %v373
        %v458 = vpop.f32.mrb[0].mxu0
        %v459 = vadd.f32 %v282, %v458
        %v460 = vpop.f32.mrb[0].mxu0
        %v461 = vadd.f32 %v282, %v460
        %v462 = vpop.f32.mrb[0].mxu0
        %v463 = vadd.f32 %v287, %v462
        %v464 = vpop.f32.mrb[0].mxu0
        %v465 = vadd.f32 %v287, %v464
        %466 = vmatprep.mubr.bf16.mxu0 0
        %467 = vmatmul.mubr.bf16.gmra.mrb[0].mxu0 %v376
        %v468 = vpop.f32.mrb[0].mxu0
        %v469 = vadd.f32 %v292, %v468
        %v470 = vpop.f32.mrb[0].mxu0
        %v471 = vadd.f32 %v292, %v470
        %v472 = vpop.f32.mrb[0].mxu0
        %v473 = vadd.f32 %v297, %v472
        %v474 = vpop.f32.mrb[0].mxu0
        %v475 = vadd.f32 %v297, %v474
        %476 = vmatprep.mubr.bf16.mxu0 0
        %477 = vmatmul.mubr.bf16.gmra.mrb[0].mxu0 %v379
        %v478 = vpop.f32.mrb[0].mxu0
        %v479 = vadd.f32 %v302, %v478
        %v480 = vpop.f32.mrb[0].mxu0
        %v481 = vadd.f32 %v302, %v480
        %v482 = vpop.f32.mrb[0].mxu0
        %v483 = vadd.f32 %v307, %v482
        %v484 = vpop.f32.mrb[0].mxu0
        %v485 = vadd.f32 %v307, %v484
        %486 = vmatprep.mubr.bf16.mxu0 0
        %487 = vmatmul.mubr.bf16.gmra.mrb[0].mxu0 %v382
        %v488 = vpop.f32.mrb[0].mxu0
        %v489 = vadd.f32 %v312, %v488
        %v490 = vpop.f32.mrb[0].mxu0
        %v491 = vadd.f32 %v312, %v490
        %v492 = vpop.f32.mrb[0].mxu0
        %v493 = vadd.f32 %v317, %v492
        %v494 = vpop.f32.mrb[0].mxu0
        %v495 = vadd.f32 %v317, %v494
        %496 = vdwg.mxu0
        %v497 = vpack.c.bf16 %v423, %v419
        %v498 = vpack.c.bf16 %v425, %v421
        %v499 = vpack.c.bf16 %v433, %v429
        %v500 = vpack.c.bf16 %v435, %v431
        %v501 = vpack.c.bf16 %v443, %v439
        %v502 = vpack.c.bf16 %v445, %v441
        %v503 = vpack.c.bf16 %v453, %v449
        %v504 = vpack.c.bf16 %v455, %v451
        %v505 = vpack.c.bf16 %v463, %v459
        %v506 = vpack.c.bf16 %v465, %v461
        %v507 = vpack.c.bf16 %v473, %v469
        %v508 = vpack.c.bf16 %v475, %v471
        %v509 = vpack.c.bf16 %v483, %v479
        %v510 = vpack.c.bf16 %v485, %v481
        %v511 = vpack.c.bf16 %v493, %v489
        %v512 = vpack.c.bf16 %v495, %v491
        %v529 = vunpack.c.l.b16 %v497
        %v530 = vunpack.c.l.b16 %v498
        %v531 = vunpack.c.h.b16 %v497
        %v532 = vunpack.c.h.b16 %v498
        %v533 = vunpack.c.l.b16 %v499
        %v534 = vunpack.c.l.b16 %v500
        %v535 = vunpack.c.h.b16 %v499
        %v536 = vunpack.c.h.b16 %v500
        %v537 = vunpack.c.l.b16 %v501
        %v538 = vunpack.c.l.b16 %v502
        %v539 = vunpack.c.h.b16 %v501
        %v540 = vunpack.c.h.b16 %v502
        %v541 = vunpack.c.l.b16 %v503
        %v542 = vunpack.c.l.b16 %v504
        %v543 = vunpack.c.h.b16 %v503
        %v544 = vunpack.c.h.b16 %v504
        %v545 = vunpack.c.l.b16 %v505
        %v546 = vunpack.c.l.b16 %v506
        %v547 = vunpack.c.h.b16 %v505
        %v548 = vunpack.c.h.b16 %v506
        %v549 = vunpack.c.l.b16 %v507
        %v550 = vunpack.c.l.b16 %v508
        %v551 = vunpack.c.h.b16 %v507
        %v552 = vunpack.c.h.b16 %v508
        %v553 = vunpack.c.l.b16 %v509
        %v554 = vunpack.c.l.b16 %v510
        %v555 = vunpack.c.h.b16 %v509
        %v556 = vunpack.c.h.b16 %v510
        %v557 = vunpack.c.l.b16 %v511
        %v558 = vunpack.c.l.b16 %v512
        %v559 = vunpack.c.h.b16 %v511
        %v560 = vunpack.c.h.b16 %v512
        %v561 = vpack.c.b16 %v530, %v529
        %v562 = vpack.c.b16 %v532, %v531
        %v563 = vpack.c.b16 %v534, %v533
        %v564 = vpack.c.b16 %v536, %v535
        %v565 = vpack.c.b16 %v538, %v537
        %v566 = vpack.c.b16 %v540, %v539
        %v567 = vpack.c.b16 %v542, %v541
        %v568 = vpack.c.b16 %v544, %v543
        %v569 = vpack.c.b16 %v546, %v545
        %v570 = vpack.c.b16 %v548, %v547
        %v571 = vpack.c.b16 %v550, %v549
        %v572 = vpack.c.b16 %v552, %v551
        %v573 = vpack.c.b16 %v554, %v553
        %v574 = vpack.c.b16 %v556, %v555
        %v575 = vpack.c.b16 %v558, %v557
        %v576 = vpack.c.b16 %v560, %v559
        %593 = vst [vmem:[%s188] sm:$0xff] %v561
        %594 = vst [vmem:[%s188 + $0x8] sm:$0xff] %v562
        %595 = vst [vmem:[%s188 + $0x10] sm:$0xff] %v563
        %596 = vst [vmem:[%s188 + $0x18] sm:$0xff] %v564
        %597 = vst [vmem:[%s188 + $0x20] sm:$0xff] %v565
        %598 = vst [vmem:[%s188 + $0x28] sm:$0xff] %v566
        %599 = vst [vmem:[%s188 + $0x30] sm:$0xff] %v567
        %600 = vst [vmem:[%s188 + $0x38] sm:$0xff] %v568
        %601 = vst [vmem:[%s188 + $0x40] sm:$0xff] %v569
        %602 = vst [vmem:[%s188 + $0x48] sm:$0xff] %v570
        %603 = vst [vmem:[%s188 + $0x50] sm:$0xff] %v571
        %604 = vst [vmem:[%s188 + $0x58] sm:$0xff] %v572
        %605 = vst [vmem:[%s188 + $0x60] sm:$0xff] %v573
        %606 = vst [vmem:[%s188 + $0x68] sm:$0xff] %v574
        %607 = vst [vmem:[%s188 + $0x70] sm:$0xff] %v575
        %608 = vst [vmem:[%s188 + $0x78] sm:$0xff] %v576
        %s609 = sand.u32 %s109, 1
        %s610 = scalar_lea.sflag [#allocation3], %s609
        %s611 = sand.u32 %s109, 1
        %s612 = smul.addr %s611, 128
        %s613 = scalar_lea.vmem [#allocation2], %s612
        // Predicated region
        $region33: #{tpu_custom_call.1} parent=31 // pred_check
          %p614 = pneg %p119
        $region34: #{tpu_custom_call.1} parent=31 // pred_check_branch
          %616 = sbr.rel (%p614) target = $region36
        $region35: #{tpu_custom_call.1} parent=31 // pred_region
          %s617 = smul.u32 2, %s22
          %s619 = ssub.s32 2048, 2048
          %620 = vsyncadd %s610, %s619
          %s621 = smul.addr %s21, 32
          %s622 = sadd.s32 %s617, %s621
          %s623 = smul.addr %s622, 64
          %s624 = scalar_lea.hbm %s3, %s623
          %s625 = sshll.u32 %s613, 4
          %s626 = int_to_ptr.vmem [resolvable:$true] %s625
          %631 = dma.vmem_to_hbm [thread:$0]  %s626, 2048, %s624, %s610, 128, 128, 8
        $region36: #{tpu_custom_call.1} parent=31 // pred_fallthru
          _
      $region32: #{tpu_custom_call.1} parent=5 // pred_fallthru
        _
      %p632 = scmp.le.s32.totalorder 2, %s12
      // Predicated region
      $region37: #{tpu_custom_call.1} parent=5 // pred_check
        %p633 = pneg %p632
      $region38: #{tpu_custom_call.1} parent=5 // pred_check_branch
        %635 = sbr.rel (%p633) target = $region40
      $region39: #{tpu_custom_call.1} parent=5 // pred_region
        %s636 = ssub.s32 %s12, 2
        // Predicated region
        $region41: #{tpu_custom_call.1} parent=39 // pred_check
          %p637 = pneg %p125
        $region42: #{tpu_custom_call.1} parent=39 // pred_check_branch
          %639 = sbr.rel (%p637) target = $region44
        $region43: #{tpu_custom_call.1} parent=39 // pred_region
          %s640 = sand.u32 %s110, 1
          %s641 = scalar_lea.sflag [#allocation3], %s640
          %s642 = sand.u32 %s110, 1
          %s643 = smul.addr %s642, 128
          %s644 = scalar_lea.vmem [#allocation2], %s643
          %645 = dma.done %s641, 2048
        $region44: #{tpu_custom_call.1} parent=39 // pred_fallthru
          _
      $region40: #{tpu_custom_call.1} parent=5 // pred_fallthru
        _
    $region6: #{tpu_custom_call.1} parent=1 // loop_footer
      %s16 = sadd.s32 1, %s12
    $region7: #{tpu_custom_call.1} parent=1 // loop_footer_branch
      %11 = sbr.rel target = $region3
    $region8: #{tpu_custom_call.1} parent=1 // loop_exit
      _
    %646 = vsyncpa [#allocation3], 1
    %s647 = scalar_lea.sflag [#allocation3], 1
    %648 = vsyncpa %s647, 1

</llo_original>
